<compile_context>
chip_gen: v6e
topology: v6e:2x2x1
jax: 0.10.0
libtpu: 0.0.40
codegen_flags: <defaults>
</compile_context>

<pallas_src>
import functools
import math

import jax
import jax.numpy as jnp
from jax.experimental import pallas as pl
from jax.experimental.pallas import tpu as pltpu


# ----------------------------- parameter glue -------------------------------

def _l2normalize(v, eps=1e-4):
    return v / (jnp.linalg.norm(v) + eps)


def spectral_norm_weight(w, u, v, multiplier, power_iterations=1):
    """Mirror SpectralNorm._update_u_v: returns multiplier * w / sigma."""
    assert power_iterations >= 1, "v is only valid after >=1 power iteration"
    for _ in range(power_iterations):
        v = _l2normalize(jnp.matmul(w.T, u))
        u = _l2normalize(jnp.matmul(w, v))
    sigma = jnp.dot(u, jnp.matmul(w, v))
    return multiplier * w / sigma


def make_feedforward_params(key, dim, hidden_dim):
    """Deterministic synthetic init matching the module's __init__ shapes."""
    k1, k2, ku1, ku2 = jax.random.split(key, 4)

    # EqualLinear(dim, hidden_dim): weight (hidden_dim, dim), bias zeros.
    w1 = jax.random.normal(k1, (hidden_dim, dim), dtype=jnp.float32)
    b1 = jnp.zeros((hidden_dim,), dtype=jnp.float32)
    # EqualLinear(hidden_dim, dim): weight (dim, hidden_dim), bias zeros.
    w2 = jax.random.normal(k2, (dim, hidden_dim), dtype=jnp.float32)
    b2 = jnp.zeros((dim,), dtype=jnp.float32)

    # SpectralNorm internal u vectors (length = weight.shape[0]); v is
    # overwritten by the first power iteration, as in PyTorch.
    u1 = _l2normalize(jax.random.normal(ku1, (hidden_dim,), dtype=jnp.float32))
    u2 = _l2normalize(jax.random.normal(ku2, (dim,), dtype=jnp.float32))

    # spectral_multiplier=True -> top singular value of the initial weight.
    mult1 = jnp.linalg.svd(w1, compute_uv=False)[0]
    mult2 = jnp.linalg.svd(w2, compute_uv=False)[0]

    # Spectral-normalized weights (one power iteration, as in forward()).
    w1_sn = spectral_norm_weight(w1, u1, u1, mult1, power_iterations=1)
    w2_sn = spectral_norm_weight(w2, u2, u2, mult2, power_iterations=1)

    # EqualLinear equalized-lr scaling: 1 / sqrt(fan_in), lr_mul = 1.
    scale1 = 1.0 / math.sqrt(dim)
    scale2 = 1.0 / math.sqrt(hidden_dim)

    # Effective f32 master weights, pre-transposed for y = x @ W_eff + b.
    w1_eff = (w1_sn * scale1).T            # (dim, hidden_dim)
    w2_eff = (w2_sn * scale2).T            # (hidden_dim, dim)
    return w1_eff, b1, w2_eff, b2


def _round_up(x, m):
    return (x + m - 1) // m * m


def _cdiv(a, b):
    return (a + b - 1) // b


def prepare_ffn_weights(w1, b1, w2, b2, compute_dtype=jnp.bfloat16):
    """One-time pad+cast of the FFN parameters (hoisted out of feed_forward)."""
    D, H = w1.shape
    d_pad = _round_up(D, 128)
    h_pad = _round_up(H, 128)
    w1p = jnp.pad(w1.astype(compute_dtype), ((0, d_pad - D), (0, h_pad - H)))
    w2p = jnp.pad(w2.astype(compute_dtype), ((0, h_pad - H), (0, d_pad - D)))
    b1p = jnp.pad(b1.reshape(1, -1).astype(jnp.float32),
                  ((0, 0), (0, h_pad - H)))
    b2p = jnp.pad(b2.reshape(1, -1).astype(jnp.float32),
                  ((0, 0), (0, d_pad - D)))
    return dict(w1=w1p, b1=b1p, w2=w2p, b2=b2p,
                dim=D, hidden=H, d_pad=d_pad, h_pad=h_pad,
                compute_dtype=jnp.dtype(compute_dtype))


# ------------------------------ Pallas kernel --------------------------------

def ffn_kernel(x_ref, w1_ref, b1_ref, w2_ref, b2_ref, o_ref, acc_ref,
               *, h_chunk, num_chunks, silu_f32):
    """Fused y = SiLU(x @ W1 + b1) @ W2 + b2 for one token tile.

    The hidden dimension is processed in `num_chunks` static slabs of
    `h_chunk` lanes so the live (tn, H) intermediate stays bounded; partial
    results accumulate into the f32 VMEM scratch `acc_ref`.
    """
    x = x_ref[...]

    def chunk_out(start):
        w1c = w1_ref[:, pl.ds(start, h_chunk)]
        h = jnp.dot(x, w1c, preferred_element_type=jnp.float32)
        h = h + b1_ref[:, pl.ds(start, h_chunk)]
        if silu_f32:
            # v5e and older: no bf16 VPU/EUP path -> keep SiLU in f32.
            h = (h * jax.nn.sigmoid(h)).astype(w2_ref.dtype)
        else:
            # v6e/v7x: bf16 SiLU halves elementwise vreg traffic.
            h = h.astype(w2_ref.dtype)
            h = h * jax.nn.sigmoid(h)
        w2c = w2_ref[pl.ds(start, h_chunk), :]
        return jnp.dot(h, w2c, preferred_element_type=jnp.float32)

    if num_chunks == 1:
        y = chunk_out(0)
    else:
        acc_ref[...] = chunk_out(0)
        for c in range(1, num_chunks):          # static, fully unrolled
            acc_ref[...] += chunk_out(c * h_chunk)
        y = acc_ref[...]

    o_ref[...] = (y + b2_ref[...]).astype(o_ref.dtype)


# ------------------------------ tiling helpers --------------------------------

def _vmem_budget_bytes():
    """~85% of physical per-core VMEM; conservative fallback if unknown."""
    try:
        cap = pltpu.get_tpu_info().vmem_capacity_bytes
        return int(cap * 0.85)
    except Exception:
        return 48 * 1024 * 1024


def _silu_in_f32(compute_dtype):
    if jnp.dtype(compute_dtype) != jnp.dtype(jnp.bfloat16):
        return True
    try:
        kind = jax.devices()[0].device_kind.lower()
    except Exception:
        return True
    # bf16 VPU/EUP exists on v6e / v7x only.
    return not ("v6" in kind or "v7" in kind or "7x" in kind)


def _choose_h_chunk(h_pad, max_chunk=1024):
    if h_pad <= max_chunk:
        return h_pad
    for c in range(max_chunk, 127, -128):
        if h_pad % c == 0:
            return c
    return 128


def _choose_block_tokens(n8, d_pad, h_pad, h_chunk, cbytes, out_bytes,
                         vmem_budget, max_tn=512):
    """Largest multiple-of-8 token tile whose working set fits the budget."""
    # Weights/biases are VMEM-resident and single-buffered (pl.Buffered(1)).
    weight_bytes = 2 * d_pad * h_pad * cbytes + 4 * (d_pad + h_pad)
    per_token = (2 * d_pad * cbytes      # x tile, double-buffered
                 + 2 * d_pad * out_bytes  # out tile, double-buffered
                 + d_pad * 4              # f32 y accumulator scratch
                 + h_chunk * 4            # f32 h chunk
                 + h_chunk * 4            # sigmoid temp
                 + h_chunk * cbytes)      # compute-dtype recast of h chunk
    avail = max(vmem_budget - weight_bytes, 8 * per_token)
    tn = min(max_tn, max(8, (avail // per_token) // 8 * 8))
    return min(tn, _round_up(n8, 8))


# ------------------------------ pallas_call builder ---------------------------

def _build_ffn_call(n_pad, tn, d_pad, h_pad, h_chunk, num_chunks, out_dtype,
                    compute_dtype, silu_f32, vmem_limit, weight_mode):
    kernel = functools.partial(ffn_kernel, h_chunk=h_chunk,
                               num_chunks=num_chunks, silu_f32=silu_f32)
    wkw = {} if weight_mode is None else {"pipeline_mode": weight_mode}
    cbytes = jnp.dtype(compute_dtype).itemsize
    cost = pl.CostEstimate(
        flops=4 * n_pad * d_pad * h_pad,
        transcendentals=n_pad * h_pad,
        bytes_accessed=(n_pad * d_pad * (cbytes + jnp.dtype(out_dtype).itemsize)
                        + 2 * d_pad * h_pad * cbytes
                        + 4 * (d_pad + h_pad)),
    )
    return pl.pallas_call(
        kernel,
        out_shape=jax.ShapeDtypeStruct((n_pad, d_pad), out_dtype),
        grid_spec=pltpu.PrefetchScalarGridSpec(
            num_scalar_prefetch=0,
            grid=(n_pad // tn,),
            in_specs=[
                pl.BlockSpec((tn, d_pad), lambda i: (i, 0)),
                pl.BlockSpec((d_pad, h_pad), lambda i: (0, 0), **wkw),
                pl.BlockSpec((1, h_pad), lambda i: (0, 0), **wkw),
                pl.BlockSpec((h_pad, d_pad), lambda i: (0, 0), **wkw),
                pl.BlockSpec((1, d_pad), lambda i: (0, 0), **wkw),
            ],
            out_specs=pl.BlockSpec((tn, d_pad), lambda i: (i, 0)),
            scratch_shapes=[pltpu.VMEM((tn, d_pad), jnp.float32)],
        ),
        compiler_params=pltpu.CompilerParams(
            dimension_semantics=("parallel",),
            vmem_limit_bytes=int(vmem_limit),
        ),
        cost_estimate=cost,
    )


def feed_forward(x, params):
    """x: (B, S, D) -> (B, S, D) through the fused FFN Pallas kernel."""
    B, S, D = x.shape
    assert D == params["dim"]
    N = B * S
    d_pad, h_pad = params["d_pad"], params["h_pad"]
    compute_dtype = params["compute_dtype"]
    cbytes = jnp.dtype(compute_dtype).itemsize
    out_dtype = x.dtype
    silu_f32 = _silu_in_f32(compute_dtype)

    vmem_budget = _vmem_budget_bytes()
    h_chunk = _choose_h_chunk(h_pad)
    num_chunks = h_pad // h_chunk

    # Token tiling: pad N only to a multiple of 8, balance tiles across the
    # grid (waste < 8 rows per step) and keep >=2 grid steps so both v7x
    # TensorCores get work.
    n8 = _round_up(N, 8)
    tn = _choose_block_tokens(n8, d_pad, h_pad, h_chunk, cbytes,
                              jnp.dtype(out_dtype).itemsize, vmem_budget)
    grid = _cdiv(n8, tn)
    if n8 > 8:
        grid = max(grid, 2)
    tn = _round_up(_cdiv(n8, grid), 8)
    n_pad = grid * tn

    # Only the activations are padded per call; weights were prepared once.
    x2d = jnp.pad(x.reshape(N, D).astype(compute_dtype),
                  ((0, n_pad - N), (0, d_pad - D)))
    args = (x2d, params["w1"], params["b1"], params["w2"], params["b2"])

    build = functools.partial(_build_ffn_call, n_pad, tn, d_pad, h_pad,
                              h_chunk, num_chunks, out_dtype, compute_dtype,
                              silu_f32, vmem_budget)
    try:
        # Weights never change across grid steps -> single-buffer them to free
        # VMEM headroom for larger token tiles.
        out = build(weight_mode=pl.Buffered(1))(*args)
    except (pltpu.LoweringException, NotImplementedError, TypeError, ValueError):
        # Fall back to default double-buffering if Buffered(1) is unsupported;
        # a genuine kernel bug will re-raise from this un-guarded call.
        out = build(weight_mode=None)(*args)

    return out[:N, :D].reshape(B, S, D)


# ---------------------------------- main --------------------------------------

if __name__ == "__main__":
    B, S, D, H = 2, 8, 32, 64
    key = jax.random.PRNGKey(0)
    kx, kp = jax.random.split(key)

    x = jax.random.normal(kx, (B, S, D), dtype=jnp.float32)
    w1, b1, w2, b2 = make_feedforward_params(kp, D, H)
    params = prepare_ffn_weights(w1, b1, w2, b2, compute_dtype=jnp.bfloat16)

    y = feed_forward(x, params)
    y = jax.block_until_ready(y)

    # Reference 1: identical bf16-operand / f32-accumulate pipeline (tight).
    silu_f32 = _silu_in_f32(jnp.bfloat16)
    xb = x.reshape(-1, D).astype(jnp.bfloat16)
    h_ref = jnp.dot(xb, w1.astype(jnp.bfloat16),
                    preferred_element_type=jnp.float32) + b1
    if silu_f32:
        h_ref = (h_ref * jax.nn.sigmoid(h_ref)).astype(jnp.bfloat16)
    else:
        h_ref = h_ref.astype(jnp.bfloat16)
        h_ref = h_ref * jax.nn.sigmoid(h_ref)
    y_ref = (jnp.dot(h_ref, w2.astype(jnp.bfloat16),
                     preferred_element_type=jnp.float32) + b2).reshape(B, S, D)
    assert jnp.allclose(y, y_ref, atol=1e-2, rtol=1e-2), "bf16 pipeline mismatch"

    # Reference 2: pure f32 math (loose sanity check of module semantics; only
    # meaningful at these small D/H given bf16 MXU operands).
    h32 = x.reshape(-1, D) @ w1 + b1
    h32 = h32 * jax.nn.sigmoid(h32)
    y32 = (h32 @ w2 + b2).reshape(B, S, D)
    assert jnp.allclose(y, y32, atol=1e-1, rtol=1e-1), "f32 semantics mismatch"

    print("KERNEL_OK")
</pallas_src>

<mosaic_0001>
module attributes {stable_mosaic.version = 11 : i64} {
  func.func @ffn_kernel(%arg0: i32, %arg1: memref<8x128xbf16, #tpu.memory_space<vmem>>, %arg2: memref<128x128xbf16, #tpu.memory_space<vmem>>, %arg3: memref<1x128xf32, #tpu.memory_space<vmem>>, %arg4: memref<128x128xbf16, #tpu.memory_space<vmem>>, %arg5: memref<1x128xf32, #tpu.memory_space<vmem>>, %arg6: memref<8x128xf32, #tpu.memory_space<vmem>>, %arg7: memref<8x128xf32, #tpu.memory_space<vmem>>) attributes {dimension_semantics = [#tpu.dimension_semantics<parallel>], iteration_bounds = array<i64: 2>, scalar_prefetch = 0 : i64, scratch_operands = 1 : i64, tpu.core_type = #tpu.core_type<tc>, window_params = [{transform_indices = @transform_0, window_bounds = array<i64: 8, 128>}, {pipeline_mode = #tpu.pipeline_mode<synchronous>, transform_indices = @transform_1, window_bounds = array<i64: 128, 128>}, {pipeline_mode = #tpu.pipeline_mode<synchronous>, transform_indices = @transform_2, window_bounds = array<i64: 1, 128>}, {pipeline_mode = #tpu.pipeline_mode<synchronous>, transform_indices = @transform_3, window_bounds = array<i64: 128, 128>}, {pipeline_mode = #tpu.pipeline_mode<synchronous>, transform_indices = @transform_4, window_bounds = array<i64: 1, 128>}, {transform_indices = @transform_5, window_bounds = array<i64: 8, 128>}]} {
    %c0 = arith.constant 0 : index
    %c0_0 = arith.constant 0 : index
    %0 = vector.load %arg1[%c0, %c0_0] : memref<8x128xbf16, #tpu.memory_space<vmem>>, vector<8x128xbf16>
    %c0_1 = arith.constant 0 : index
    %c0_2 = arith.constant 0 : index
    %1 = vector.load %arg2[%c0_1, %c0_2] : memref<128x128xbf16, #tpu.memory_space<vmem>>, vector<128x128xbf16>
    %cst = arith.constant dense<0.000000e+00> : vector<8x128xf32>
    %2 = tpu.matmul %0, %1, %cst {dimension_numbers = #tpu.dot_dimension_numbers<[1], [0], [0], [1], [0, 0, 1, 1], [], []>} : vector<8x128xbf16>, vector<128x128xbf16>, vector<8x128xf32> -> vector<8x128xf32>
    %c0_3 = arith.constant 0 : index
    %c0_4 = arith.constant 0 : index
    %3 = vector.load %arg3[%c0_3, %c0_4] : memref<1x128xf32, #tpu.memory_space<vmem>>, vector<1x128xf32>
    %4 = vector.broadcast %3 : vector<1x128xf32> to vector<8x128xf32>
    %5 = arith.addf %2, %4 : vector<8x128xf32>
    %6 = arith.negf %5 : vector<8x128xf32>
    %7 = math.exp %6 : vector<8x128xf32>
    %cst_5 = arith.constant 1.000000e+00 : f32
    %8 = vector.broadcast %cst_5 : f32 to vector<8x128xf32>
    %9 = arith.addf %8, %7 : vector<8x128xf32>
    %10 = arith.divf %8, %9 : vector<8x128xf32>
    %11 = arith.mulf %5, %10 : vector<8x128xf32>
    %12 = arith.truncf %11 : vector<8x128xf32> to vector<8x128xbf16>
    %c0_6 = arith.constant 0 : index
    %c0_7 = arith.constant 0 : index
    %13 = vector.load %arg4[%c0_6, %c0_7] : memref<128x128xbf16, #tpu.memory_space<vmem>>, vector<128x128xbf16>
    %cst_8 = arith.constant dense<0.000000e+00> : vector<8x128xf32>
    %14 = tpu.matmul %12, %13, %cst_8 {dimension_numbers = #tpu.dot_dimension_numbers<[1], [0], [0], [1], [0, 0, 1, 1], [], []>} : vector<8x128xbf16>, vector<128x128xbf16>, vector<8x128xf32> -> vector<8x128xf32>
    %c0_9 = arith.constant 0 : index
    %c0_10 = arith.constant 0 : index
    %15 = vector.load %arg5[%c0_9, %c0_10] : memref<1x128xf32, #tpu.memory_space<vmem>>, vector<1x128xf32>
    %16 = vector.broadcast %15 : vector<1x128xf32> to vector<8x128xf32>
    %17 = arith.addf %14, %16 : vector<8x128xf32>
    %c0_11 = arith.constant 0 : index
    %c0_12 = arith.constant 0 : index
    %18 = vector.load %arg6[%c0_11, %c0_12] : memref<8x128xf32, #tpu.memory_space<vmem>>, vector<8x128xf32>
    tpu.vector_store %arg6[%c0_11, %c0_12], %17 {strides = array<i32>} : memref<8x128xf32, #tpu.memory_space<vmem>>, vector<8x128xf32>,
    return
  }
  func.func @transform_0(%arg0: i32) -> (i32, i32) {
    %c0_i32 = arith.constant 0 : i32
    %c0_i32_0 = arith.constant 0 : i32
    return %arg0, %c0_i32 : i32, i32
  }
  func.func @transform_1(%arg0: i32) -> (i32, i32) {
    %c0_i32 = arith.constant 0 : i32
    %c0_i32_0 = arith.constant 0 : i32
    %c0_i32_1 = arith.constant 0 : i32
    return %c0_i32, %c0_i32_0 : i32, i32
  }
  func.func @transform_2(%arg0: i32) -> (i32, i32) {
    %c0_i32 = arith.constant 0 : i32
    %c0_i32_0 = arith.constant 0 : i32
    %c0_i32_1 = arith.constant 0 : i32
    return %c0_i32, %c0_i32_0 : i32, i32
  }
  func.func @transform_3(%arg0: i32) -> (i32, i32) {
    %c0_i32 = arith.constant 0 : i32
    %c0_i32_0 = arith.constant 0 : i32
    %c0_i32_1 = arith.constant 0 : i32
    return %c0_i32, %c0_i32_0 : i32, i32
  }
  func.func @transform_4(%arg0: i32) -> (i32, i32) {
    %c0_i32 = arith.constant 0 : i32
    %c0_i32_0 = arith.constant 0 : i32
    %c0_i32_1 = arith.constant 0 : i32
    return %c0_i32, %c0_i32_0 : i32, i32
  }
  func.func @transform_5(%arg0: i32) -> (i32, i32) {
    %c0_i32 = arith.constant 0 : i32
    %c0_i32_0 = arith.constant 0 : i32
    return %arg0, %c0_i32 : i32, i32
  }
}

</mosaic_0001>

<llo_original>
// kernel: tpu_custom_call.1
$region0: #{tpu_custom_call.1}
  #allocation0 [shape = 'u32[]', space=smem, size = 0x4, offset = 0x4, fixed_abs, tag = 'smem constant byte address 0x4 - core index']
  #allocation1 [shape = 'u32[144,128]{1,0:T(1,128)}', space=vmem, size = 0x12000, scoped, tag = 'internal scratch']
  #allocation2 [shape = 'f32[8,128]{1,0:T(8,128)}', space=vmem, size = 0x1000, scoped, tag = 'scratch operand']
  %s0 = inlined_call_operand.hbm [shape: bf16[16,128], index: 0, kind: input, shape index: {}]
  %s1 = inlined_call_operand.hbm [shape: bf16[128,128], index: 1, kind: input, shape index: {}]
  %s2 = inlined_call_operand.vmem [shape: f32[1,128], index: 2, kind: input, shape index: {}]
  %s3 = inlined_call_operand.hbm [shape: bf16[128,128], index: 3, kind: input, shape index: {}]
  %s4 = inlined_call_operand.vmem [shape: f32[1,128], index: 4, kind: input, shape index: {}]
  %s5 = inlined_call_operand.hbm [shape: f32[16,128], index: 5, kind: output, shape index: {}]
  %s6 = sld [smem:[#allocation0]]
  $region65: #{tpu_custom_call.1} parent=0
    _
  %s8 = ssub.s32 1, %s6
  %s9 = scalar_select 0, %s8, %s6
  $region1: #{tpu_custom_call.1} parent=0
    #allocation3 [shape = 'u8[4096]{0}', space=vmem, size = 0x1000, scoped, tag = 'input window, operand 0']
    #allocation4 [shape = 's32[2]{0}', space=sflag, size = 0x8, scoped, tag = 'scoped memory for tpu_custom_call.1']
    #allocation5 [shape = 's32[2]{0}', space=sflag, size = 0x8, scoped, tag = 'scoped memory for tpu_custom_call.1']
    #allocation6 [shape = 'u8[32768]{0}', space=vmem, size = 0x8000, scoped, tag = 'input window, operand 1, single buffered']
    #allocation7 [shape = 's32[1]{0}', space=sflag, size = 0x4, scoped, tag = 'scoped memory for tpu_custom_call.1']
    #allocation8 [shape = 'u8[32768]{0}', space=vmem, size = 0x8000, scoped, tag = 'input window, operand 3, single buffered']
    #allocation9 [shape = 'u8[8192]{0}', space=vmem, size = 0x2000, scoped, tag = 'output window, operand 0']
    %10 = vsyncpa [#allocation4], 0
    %s11 = scalar_lea.sflag [#allocation4], 1
    %12 = vsyncpa %s11, 0
    %13 = vsyncpa [#allocation7], 0
    %14 = vsyncpa [#allocation5], 0
    %s15 = scalar_lea.sflag [#allocation5], 1
    %16 = vsyncpa %s15, 0
    loop: start=0, step=1, limit=4
    $region2: #{tpu_custom_call.1} parent=1 // loop_pre_header
      _
    $region3: #{tpu_custom_call.1} parent=1 // loop_header
      %s18 = sphi 0, %s22
      %p19 = scmp.ge.s32.totalorder %s18, 4
      %s28 = sphi 0, %s30
      %s31 = sphi 0, %s28
      %s32 = sphi 0, %s31
      %s48 = sphi 0, %s32
      %s52 = sphi 0, %s52
      %s54 = sphi 0, %s52
      %s55 = sphi 0, %s54
      %s69 = sphi 0, %s55
      %s73 = sphi 0, %s73
      %s75 = sphi 0, %s73
      %s76 = sphi 0, %s75
      %s90 = sphi 0, %s76
      %s94 = sphi 0, %s94
      %s96 = sphi 0, %s94
      %s97 = sphi 0, %s96
      %s111 = sphi 0, %s97
      %s115 = sphi 0, %s115
      %s117 = sphi 0, %s115
      %s118 = sphi 0, %s117
      %s132 = sphi 0, %s118
      %s138 = sphi 0, %s140
      %s141 = sphi 0, %s138
      %s142 = sphi 0, %s141
      %s158 = sphi 0, %s142
    $region4: #{tpu_custom_call.1} parent=1 // loop_header_branch
      %21 = sbr.rel (%p19) target = $region8
    $region5: #{tpu_custom_call.1} parent=1 // loop_body
      %s23 = ssub.s32 %s18, 1
      %s24 = ssub.s32 %s18, 2
      %s25 = sadd.s32 %s18, 1
      %s26 = ssub.s32 %s18, %s25
      %p27 = scmp.eq.s32.totalorder %s26, 0
      %s29 = sadd.s32 %s28, 1
      %s30 = scalar_select %p27, %s28, %s29
      %p33 = pneg %p27
      %p34 = scmp.eq.s32.totalorder %s18, 1
      %p35 = por %p33, %p34
      %p36 = scmp.ne.s32.totalorder %s28, %s31
      %p37 = scmp.eq.s32.totalorder %s18, 0
      %p38 = por %p36, %p37
      %p39 = scmp.ne.s32.totalorder %s28, %s31
      %p40 = scmp.eq.s32.totalorder %s23, 1
      %p41 = por %p39, %p40
      %p42 = scmp.ne.s32.totalorder %s31, %s32
      %p43 = scmp.eq.s32.totalorder %s23, 0
      %p44 = por %p42, %p43
      %p45 = scmp.ne.s32.totalorder %s31, %s32
      %p46 = scmp.eq.s32.totalorder %s24, 1
      %p47 = por %p45, %p46
      %p49 = scmp.ne.s32.totalorder %s32, %s48
      %p50 = scmp.eq.s32.totalorder %s24, 0
      %p51 = por %p49, %p50
      %s53 = sadd.s32 %s52, 1
      %p56 = scmp.eq.s32.totalorder %s18, 1
      %p57 = scmp.ne.s32.totalorder %s52, %s54
      %p58 = scmp.eq.s32.totalorder %s18, 0
      %p59 = por %p57, %p58
      %p60 = scmp.ne.s32.totalorder %s52, %s54
      %p61 = scmp.eq.s32.totalorder %s23, 1
      %p62 = por %p60, %p61
      %p63 = scmp.ne.s32.totalorder %s54, %s55
      %p64 = scmp.eq.s32.totalorder %s23, 0
      %p65 = por %p63, %p64
      %p66 = scmp.ne.s32.totalorder %s54, %s55
      %p67 = scmp.eq.s32.totalorder %s24, 1
      %p68 = por %p66, %p67
      %p70 = scmp.ne.s32.totalorder %s55, %s69
      %p71 = scmp.eq.s32.totalorder %s24, 0
      %p72 = por %p70, %p71
      %s74 = sadd.s32 %s73, 1
      %p77 = scmp.eq.s32.totalorder %s18, 1
      %p78 = scmp.ne.s32.totalorder %s73, %s75
      %p79 = scmp.eq.s32.totalorder %s18, 0
      %p80 = por %p78, %p79
      %p81 = scmp.ne.s32.totalorder %s73, %s75
      %p82 = scmp.eq.s32.totalorder %s23, 1
      %p83 = por %p81, %p82
      %p84 = scmp.ne.s32.totalorder %s75, %s76
      %p85 = scmp.eq.s32.totalorder %s23, 0
      %p86 = por %p84, %p85
      %p87 = scmp.ne.s32.totalorder %s75, %s76
      %p88 = scmp.eq.s32.totalorder %s24, 1
      %p89 = por %p87, %p88
      %p91 = scmp.ne.s32.totalorder %s76, %s90
      %p92 = scmp.eq.s32.totalorder %s24, 0
      %p93 = por %p91, %p92
      %s95 = sadd.s32 %s94, 1
      %p98 = scmp.eq.s32.totalorder %s18, 1
      %p99 = scmp.ne.s32.totalorder %s94, %s96
      %p100 = scmp.eq.s32.totalorder %s18, 0
      %p101 = por %p99, %p100
      %p102 = scmp.ne.s32.totalorder %s94, %s96
      %p103 = scmp.eq.s32.totalorder %s23, 1
      %p104 = por %p102, %p103
      %p105 = scmp.ne.s32.totalorder %s96, %s97
      %p106 = scmp.eq.s32.totalorder %s23, 0
      %p107 = por %p105, %p106
      %p108 = scmp.ne.s32.totalorder %s96, %s97
      %p109 = scmp.eq.s32.totalorder %s24, 1
      %p110 = por %p108, %p109
      %p112 = scmp.ne.s32.totalorder %s97, %s111
      %p113 = scmp.eq.s32.totalorder %s24, 0
      %p114 = por %p112, %p113
      %s116 = sadd.s32 %s115, 1
      %p119 = scmp.eq.s32.totalorder %s18, 1
      %p120 = scmp.ne.s32.totalorder %s115, %s117
      %p121 = scmp.eq.s32.totalorder %s18, 0
      %p122 = por %p120, %p121
      %p123 = scmp.ne.s32.totalorder %s115, %s117
      %p124 = scmp.eq.s32.totalorder %s23, 1
      %p125 = por %p123, %p124
      %p126 = scmp.ne.s32.totalorder %s117, %s118
      %p127 = scmp.eq.s32.totalorder %s23, 0
      %p128 = por %p126, %p127
      %p129 = scmp.ne.s32.totalorder %s117, %s118
      %p130 = scmp.eq.s32.totalorder %s24, 1
      %p131 = por %p129, %p130
      %p133 = scmp.ne.s32.totalorder %s118, %s132
      %p134 = scmp.eq.s32.totalorder %s24, 0
      %p135 = por %p133, %p134
      %s136 = ssub.s32 %s18, %s25
      %p137 = scmp.eq.s32.totalorder %s136, 0
      %s139 = sadd.s32 %s138, 1
      %s140 = scalar_select %p137, %s138, %s139
      %p143 = pneg %p137
      %p144 = scmp.eq.s32.totalorder %s18, 1
      %p145 = por %p143, %p144
      %p146 = scmp.ne.s32.totalorder %s138, %s141
      %p147 = scmp.eq.s32.totalorder %s18, 0
      %p148 = por %p146, %p147
      %p149 = scmp.ne.s32.totalorder %s138, %s141
      %p150 = scmp.eq.s32.totalorder %s23, 1
      %p151 = por %p149, %p150
      %p152 = scmp.ne.s32.totalorder %s141, %s142
      %p153 = scmp.eq.s32.totalorder %s23, 0
      %p154 = por %p152, %p153
      %p155 = scmp.ne.s32.totalorder %s141, %s142
      %p156 = scmp.eq.s32.totalorder %s24, 1
      %p157 = por %p155, %p156
      %p159 = scmp.ne.s32.totalorder %s142, %s158
      %p160 = scmp.eq.s32.totalorder %s24, 0
      %p161 = por %p159, %p160
      %p162 = scmp.le.s32.totalorder 1, %s18
      %p163 = scmp.lt.s32.totalorder %s18, 3
      %p164 = pnand %p162, %p163
      %p165 = pneg %p164
      // Predicated region
      $region9: #{tpu_custom_call.1} parent=5 // pred_check
        _
      $region10: #{tpu_custom_call.1} parent=5 // pred_check_branch
        %167 = sbr.rel (%p164) target = $region12
      $region11: #{tpu_custom_call.1} parent=5 // pred_region
        %s168 = ssub.s32 %s18, 1
        // Predicated region
        $region13: #{tpu_custom_call.1} parent=11 // pred_check
          %p169 = pneg %p65
        $region14: #{tpu_custom_call.1} parent=11 // pred_check_branch
          %171 = sbr.rel (%p169) target = $region16
        $region15: #{tpu_custom_call.1} parent=11 // pred_region
          %s173 = ssub.s32 1024, 1024
          %174 = vsyncadd [#allocation7], %s173
          %s175 = sshll.u32 [#allocation6], 4
          %s176 = int_to_ptr.vmem [resolvable:$true] %s175
          %181 = dma.hbm_to_vmem [thread:$0]  %s1, 1024, %s176, [#allocation7], 64, 64, 4
        $region16: #{tpu_custom_call.1} parent=11 // pred_fallthru
          _
        // Predicated region
        $region17: #{tpu_custom_call.1} parent=11 // pred_check
          %p182 = pneg %p86
        $region18: #{tpu_custom_call.1} parent=11 // pred_check_branch
          %184 = sbr.rel (%p182) target = $region20
        $region19: #{tpu_custom_call.1} parent=11 // pred_region
          _
        $region20: #{tpu_custom_call.1} parent=11 // pred_fallthru
          _
        // Predicated region
        $region21: #{tpu_custom_call.1} parent=11 // pred_check
          %p185 = pneg %p107
        $region22: #{tpu_custom_call.1} parent=11 // pred_check_branch
          %187 = sbr.rel (%p185) target = $region24
        $region23: #{tpu_custom_call.1} parent=11 // pred_region
          %s189 = ssub.s32 1024, 1024
          %190 = vsyncadd [#allocation7], %s189
          %s191 = sshll.u32 [#allocation8], 4
          %s192 = int_to_ptr.vmem [resolvable:$true] %s191
          %197 = dma.hbm_to_vmem [thread:$0]  %s3, 1024, %s192, [#allocation7], 64, 64, 4
        $region24: #{tpu_custom_call.1} parent=11 // pred_fallthru
          _
        // Predicated region
        $region25: #{tpu_custom_call.1} parent=11 // pred_check
          %p198 = pneg %p128
        $region26: #{tpu_custom_call.1} parent=11 // pred_check_branch
          %200 = sbr.rel (%p198) target = $region28
        $region27: #{tpu_custom_call.1} parent=11 // pred_region
          _
        $region28: #{tpu_custom_call.1} parent=11 // pred_fallthru
          _
      $region12: #{tpu_custom_call.1} parent=5 // pred_fallthru
        _
      %p201 = scmp.lt.s32.totalorder %s18, 2
      // Predicated region
      $region29: #{tpu_custom_call.1} parent=5 // pred_check
        %p202 = pneg %p201
      $region30: #{tpu_custom_call.1} parent=5 // pred_check_branch
        %204 = sbr.rel (%p202) target = $region32
      $region31: #{tpu_custom_call.1} parent=5 // pred_region
        // Predicated region
        $region33: #{tpu_custom_call.1} parent=31 // pred_check
          %p205 = pneg %p38
        $region34: #{tpu_custom_call.1} parent=31 // pred_check_branch
          %207 = sbr.rel (%p205) target = $region36
        $region35: #{tpu_custom_call.1} parent=31 // pred_region
          %s208 = sand.u32 %s28, 1
          %s209 = scalar_lea.sflag [#allocation4], %s208
          %s210 = sand.u32 %s28, 1
          %s211 = smul.addr %s210, 4
          %s212 = scalar_lea.vmem [#allocation3], %s211
          %s214 = ssub.s32 64, 64
          %215 = vsyncadd %s209, %s214
          %s216 = smul.addr %s18, 64
          %s217 = scalar_lea.hbm %s0, %s216
          %s219 = sshll.u32 %s212, 4
          %s220 = int_to_ptr.vmem [resolvable:$true] %s219
          %222 = dma.hbm_to_vmem [thread:$0]  %s217, 64, %s220, %s209
        $region36: #{tpu_custom_call.1} parent=31 // pred_fallthru
          _
      $region32: #{tpu_custom_call.1} parent=5 // pred_fallthru
        _
      %p223 = scmp.le.s32.totalorder 1, %s18
      %p224 = scmp.lt.s32.totalorder %s18, 3
      %p225 = pnand %p223, %p224
      %p226 = pneg %p225
      // Predicated region
      $region37: #{tpu_custom_call.1} parent=5 // pred_check
        _
      $region38: #{tpu_custom_call.1} parent=5 // pred_check_branch
        %228 = sbr.rel (%p225) target = $region40
      $region39: #{tpu_custom_call.1} parent=5 // pred_region
        %s229 = ssub.s32 %s18, 1
        %s230 = sand.u32 %s31, 1
        %s231 = scalar_lea.sflag [#allocation4], %s230
        %s232 = sand.u32 %s31, 1
        %s233 = smul.addr %s232, 4
        %s234 = scalar_lea.vmem [#allocation3], %s233
        // Predicated region
        $region41: #{tpu_custom_call.1} parent=39 // pred_check
          %p235 = pneg %p44
        $region42: #{tpu_custom_call.1} parent=39 // pred_check_branch
          %237 = sbr.rel (%p235) target = $region44
        $region43: #{tpu_custom_call.1} parent=39 // pred_region
          %238 = dma.done %s231, 64
        $region44: #{tpu_custom_call.1} parent=39 // pred_fallthru
          _
        // Predicated region
        $region45: #{tpu_custom_call.1} parent=39 // pred_check
          %p239 = pneg %p65
        $region46: #{tpu_custom_call.1} parent=39 // pred_check_branch
          %241 = sbr.rel (%p239) target = $region48
        $region47: #{tpu_custom_call.1} parent=39 // pred_region
          %242 = dma.done [#allocation7], 1024
        $region48: #{tpu_custom_call.1} parent=39 // pred_fallthru
          _
        // Predicated region
        $region49: #{tpu_custom_call.1} parent=39 // pred_check
          %p243 = pneg %p107
        $region50: #{tpu_custom_call.1} parent=39 // pred_check_branch
          %245 = sbr.rel (%p243) target = $region52
        $region51: #{tpu_custom_call.1} parent=39 // pred_region
          %246 = dma.done [#allocation7], 1024
        $region52: #{tpu_custom_call.1} parent=39 // pred_fallthru
          _
        %s247 = sand.u32 %s31, 1
        %s248 = scalar_lea.sflag [#allocation4], %s247
        %s249 = sand.u32 %s31, 1
        %s250 = smul.addr %s249, 4
        %s251 = scalar_lea.vmem [#allocation3], %s250
        %p252 = pneg %p44
        %p253 = pneg %p41
        %p254 = pneg %p65
        %p255 = pneg %p62
        %p256 = pneg %p86
        %p257 = pneg %p83
        %p258 = pneg %p107
        %p259 = pneg %p104
        %p260 = pneg %p128
        %p261 = pneg %p125
        %p262 = pneg %p154
        %p263 = pneg %p151
        %s264 = sand.u32 %s141, 1
        %s265 = scalar_lea.sflag [#allocation5], %s264
        %s266 = sand.u32 %s141, 1
        %s267 = smul.addr %s266, 8
        %s268 = scalar_lea.vmem [#allocation9], %s267
        %v270 = vld [vmem:[%s234] sm:$0xf]
        %v271 = vld [vmem:[#allocation6] sm:$0xf]
        %v272 = vld [vmem:[#allocation6 + $0x4] sm:$0xf]
        %v273 = vld [vmem:[#allocation6 + $0x8] sm:$0xf]
        %v274 = vld [vmem:[#allocation6 + $0xc] sm:$0xf]
        %v275 = vld [vmem:[#allocation6 + $0x10] sm:$0xf]
        %v276 = vld [vmem:[#allocation6 + $0x14] sm:$0xf]
        %v277 = vld [vmem:[#allocation6 + $0x18] sm:$0xf]
        %v278 = vld [vmem:[#allocation6 + $0x1c] sm:$0xf]
        %v279 = vld [vmem:[#allocation6 + $0x20] sm:$0xf]
        %v280 = vld [vmem:[#allocation6 + $0x24] sm:$0xf]
        %v281 = vld [vmem:[#allocation6 + $0x28] sm:$0xf]
        %v282 = vld [vmem:[#allocation6 + $0x2c] sm:$0xf]
        %v283 = vld [vmem:[#allocation6 + $0x30] sm:$0xf]
        %v284 = vld [vmem:[#allocation6 + $0x34] sm:$0xf]
        %v285 = vld [vmem:[#allocation6 + $0x38] sm:$0xf]
        %v286 = vld [vmem:[#allocation6 + $0x3c] sm:$0xf]
        %v287 = vld [vmem:[%s2] sm:$0x1]
        %v289 = vlaneseq
        %v290 = vshrl.u32 %v289, 7
        %v291 = vsub.s32 0, %v290
        %v292 = vrot.slane %v287, %v291
        %v310 = vunpack.c.l.b16 %v271
        %v311 = vunpack.c.l.b16 %v272
        %v312 = vunpack.c.l.b16 %v273
        %v313 = vunpack.c.l.b16 %v274
        %v314 = vunpack.c.l.b16 %v275
        %v315 = vunpack.c.l.b16 %v276
        %v316 = vunpack.c.l.b16 %v277
        %v317 = vunpack.c.l.b16 %v278
        %v318 = vunpack.c.l.b16 %v279
        %v319 = vunpack.c.l.b16 %v280
        %v320 = vunpack.c.l.b16 %v281
        %v321 = vunpack.c.l.b16 %v282
        %v322 = vunpack.c.l.b16 %v283
        %v323 = vunpack.c.l.b16 %v284
        %v324 = vunpack.c.l.b16 %v285
        %v325 = vunpack.c.l.b16 %v286
        %v326 = vpack.c.b16 %v311, %v310
        %v327 = vpack.c.b16 %v313, %v312
        %v328 = vpack.c.b16 %v315, %v314
        %v329 = vpack.c.b16 %v317, %v316
        %v330 = vpack.c.b16 %v319, %v318
        %v331 = vpack.c.b16 %v321, %v320
        %v332 = vpack.c.b16 %v323, %v322
        %v333 = vpack.c.b16 %v325, %v324
        %342 = vmatprep.subr.bf16.mxu0 0
        %343 = vmatpush1.bf16.msra.mxu0 %v333
        %344 = vmatprep.subr.bf16.mxu0 0
        %345 = vmatpush1.bf16.msra.mxu0 %v332
        %346 = vmatprep.subr.bf16.mxu0 0
        %347 = vmatpush1.bf16.msra.mxu0 %v331
        %348 = vmatprep.subr.bf16.mxu0 0
        %349 = vmatpush1.bf16.msra.mxu0 %v330
        %350 = vmatprep.subr.bf16.mxu0 0
        %351 = vmatpush1.bf16.msra.mxu0 %v329
        %352 = vmatprep.subr.bf16.mxu0 0
        %353 = vmatpush1.bf16.msra.mxu0 %v328
        %354 = vmatprep.subr.bf16.mxu0 0
        %355 = vmatpush1.bf16.msra.mxu0 %v327
        %356 = vmatprep.subr.bf16.mxu0 0
        %357 = vmatpush1.bf16.msra.mxu0 %v326
        %358 = vmatprep.subr.bf16.mxu0 0
        %359 = vmatpush2.bf16.msra.mxu0 0
        %360 = vmatprep.subr.bf16.mxu0 0
        %361 = vmatpush2.bf16.msra.mxu0 0
        %362 = vmatprep.subr.bf16.mxu0 0
        %363 = vmatpush2.bf16.msra.mxu0 0
        %364 = vmatprep.subr.bf16.mxu0 0
        %365 = vmatpush2.bf16.msra.mxu0 0
        %366 = vmatprep.subr.bf16.mxu0 0
        %367 = vmatpush2.bf16.msra.mxu0 0
        %368 = vmatprep.subr.bf16.mxu0 0
        %369 = vmatpush2.bf16.msra.mxu0 0
        %370 = vmatprep.subr.bf16.mxu0 0
        %371 = vmatpush2.bf16.msra.mxu0 0
        %372 = vmatprep.subr.bf16.mxu0 0
        %373 = vmatpush2.bf16.msra.mxu0 0
        %374 = vmatprep.mubr.bf16.mxu0 0
        %375 = vmatmul.mubr.bf16.gmra.mxu0 %v270
        %v376 = vpop.f32.mrf.mxu0
        %v377 = vadd.f32 %v292, %v376
        %v378 = vpop.f32.mrf.mxu0
        %v379 = vpop.f32.mrf.mxu0
        %v380 = vpop.f32.mrf.mxu0
        %381 = vdwg.mxu0
        %v382 = vxor.u32 %v377, 2147483648
        %v383 = vmul.f32 %v382, 1.442695
        %v384 = vpow.pop %v383
        %v385 = vadd.f32 %v384, 1.0
        %v386 = vrcp.pop %v385
        %v387 = vmul.f32 1.0, %v386
        %v388 = vmul.f32 %v377, %v387
        %v389 = vpack.c.bf16 %v388, %v388
        %v390 = vld [vmem:[#allocation8] sm:$0xf]
        %v391 = vld [vmem:[#allocation8 + $0x4] sm:$0xf]
        %v392 = vld [vmem:[#allocation8 + $0x8] sm:$0xf]
        %v393 = vld [vmem:[#allocation8 + $0xc] sm:$0xf]
        %v394 = vld [vmem:[#allocation8 + $0x10] sm:$0xf]
        %v395 = vld [vmem:[#allocation8 + $0x14] sm:$0xf]
        %v396 = vld [vmem:[#allocation8 + $0x18] sm:$0xf]
        %v397 = vld [vmem:[#allocation8 + $0x1c] sm:$0xf]
        %v398 = vld [vmem:[#allocation8 + $0x20] sm:$0xf]
        %v399 = vld [vmem:[#allocation8 + $0x24] sm:$0xf]
        %v400 = vld [vmem:[#allocation8 + $0x28] sm:$0xf]
        %v401 = vld [vmem:[#allocation8 + $0x2c] sm:$0xf]
        %v402 = vld [vmem:[#allocation8 + $0x30] sm:$0xf]
        %v403 = vld [vmem:[#allocation8 + $0x34] sm:$0xf]
        %v404 = vld [vmem:[#allocation8 + $0x38] sm:$0xf]
        %v405 = vld [vmem:[#allocation8 + $0x3c] sm:$0xf]
        %v406 = vld [vmem:[%s4] sm:$0x1]
        %v408 = vlaneseq
        %v409 = vshrl.u32 %v408, 7
        %v410 = vsub.s32 0, %v409
        %v411 = vrot.slane %v406, %v410
        %v429 = vunpack.c.l.b16 %v390
        %v430 = vunpack.c.l.b16 %v391
        %v431 = vunpack.c.l.b16 %v392
        %v432 = vunpack.c.l.b16 %v393
        %v433 = vunpack.c.l.b16 %v394
        %v434 = vunpack.c.l.b16 %v395
        %v435 = vunpack.c.l.b16 %v396
        %v436 = vunpack.c.l.b16 %v397
        %v437 = vunpack.c.l.b16 %v398
        %v438 = vunpack.c.l.b16 %v399
        %v439 = vunpack.c.l.b16 %v400
        %v440 = vunpack.c.l.b16 %v401
        %v441 = vunpack.c.l.b16 %v402
        %v442 = vunpack.c.l.b16 %v403
        %v443 = vunpack.c.l.b16 %v404
        %v444 = vunpack.c.l.b16 %v405
        %v445 = vpack.c.b16 %v430, %v429
        %v446 = vpack.c.b16 %v432, %v431
        %v447 = vpack.c.b16 %v434, %v433
        %v448 = vpack.c.b16 %v436, %v435
        %v449 = vpack.c.b16 %v438, %v437
        %v450 = vpack.c.b16 %v440, %v439
        %v451 = vpack.c.b16 %v442, %v441
        %v452 = vpack.c.b16 %v444, %v443
        %461 = vmatprep.subr.bf16.mxu0 0
        %462 = vmatpush1.bf16.msra.mxu0 %v452
        %463 = vmatprep.subr.bf16.mxu0 0
        %464 = vmatpush1.bf16.msra.mxu0 %v451
        %465 = vmatprep.subr.bf16.mxu0 0
        %466 = vmatpush1.bf16.msra.mxu0 %v450
        %467 = vmatprep.subr.bf16.mxu0 0
        %468 = vmatpush1.bf16.msra.mxu0 %v449
        %469 = vmatprep.subr.bf16.mxu0 0
        %470 = vmatpush1.bf16.msra.mxu0 %v448
        %471 = vmatprep.subr.bf16.mxu0 0
        %472 = vmatpush1.bf16.msra.mxu0 %v447
        %473 = vmatprep.subr.bf16.mxu0 0
        %474 = vmatpush1.bf16.msra.mxu0 %v446
        %475 = vmatprep.subr.bf16.mxu0 0
        %476 = vmatpush1.bf16.msra.mxu0 %v445
        %477 = vmatprep.subr.bf16.mxu0 0
        %478 = vmatpush2.bf16.msra.mxu0 0
        %479 = vmatprep.subr.bf16.mxu0 0
        %480 = vmatpush2.bf16.msra.mxu0 0
        %481 = vmatprep.subr.bf16.mxu0 0
        %482 = vmatpush2.bf16.msra.mxu0 0
        %483 = vmatprep.subr.bf16.mxu0 0
        %484 = vmatpush2.bf16.msra.mxu0 0
        %485 = vmatprep.subr.bf16.mxu0 0
        %486 = vmatpush2.bf16.msra.mxu0 0
        %487 = vmatprep.subr.bf16.mxu0 0
        %488 = vmatpush2.bf16.msra.mxu0 0
        %489 = vmatprep.subr.bf16.mxu0 0
        %490 = vmatpush2.bf16.msra.mxu0 0
        %491 = vmatprep.subr.bf16.mxu0 0
        %492 = vmatpush2.bf16.msra.mxu0 0
        %493 = vmatprep.mubr.bf16.mxu0 0
        %494 = vmatmul.mubr.bf16.gmra.mxu0 %v389
        %v495 = vpop.f32.mrf.mxu0
        %v496 = vadd.f32 %v411, %v495
        %v497 = vpop.f32.mrf.mxu0
        %v498 = vpop.f32.mrf.mxu0
        %v499 = vpop.f32.mrf.mxu0
        %500 = vdwg.mxu0
        %501 = vst [vmem:[%s268] sm:$0xff] %v496
        %s502 = sand.u32 %s141, 1
        %s503 = scalar_lea.sflag [#allocation5], %s502
        %s504 = sand.u32 %s141, 1
        %s505 = smul.addr %s504, 8
        %s506 = scalar_lea.vmem [#allocation9], %s505
        // Predicated region
        $region53: #{tpu_custom_call.1} parent=39 // pred_check
          %p507 = pneg %p151
        $region54: #{tpu_custom_call.1} parent=39 // pred_check_branch
          %509 = sbr.rel (%p507) target = $region56
        $region55: #{tpu_custom_call.1} parent=39 // pred_region
          %s511 = ssub.s32 128, 128
          %512 = vsyncadd %s503, %s511
          %s513 = smul.addr %s23, 128
          %s514 = scalar_lea.hbm %s5, %s513
          %s516 = sshll.u32 %s506, 4
          %s517 = int_to_ptr.vmem [resolvable:$true] %s516
          %519 = dma.vmem_to_hbm [thread:$0]  %s517, 128, %s514, %s503
        $region56: #{tpu_custom_call.1} parent=39 // pred_fallthru
          _
      $region40: #{tpu_custom_call.1} parent=5 // pred_fallthru
        _
      %p520 = scmp.le.s32.totalorder 2, %s18
      // Predicated region
      $region57: #{tpu_custom_call.1} parent=5 // pred_check
        %p521 = pneg %p520
      $region58: #{tpu_custom_call.1} parent=5 // pred_check_branch
        %523 = sbr.rel (%p521) target = $region60
      $region59: #{tpu_custom_call.1} parent=5 // pred_region
        %s524 = ssub.s32 %s18, 2
        // Predicated region
        $region61: #{tpu_custom_call.1} parent=59 // pred_check
          %p525 = pneg %p157
        $region62: #{tpu_custom_call.1} parent=59 // pred_check_branch
          %527 = sbr.rel (%p525) target = $region64
        $region63: #{tpu_custom_call.1} parent=59 // pred_region
          %s528 = sand.u32 %s142, 1
          %s529 = scalar_lea.sflag [#allocation5], %s528
          %s530 = sand.u32 %s142, 1
          %s531 = smul.addr %s530, 8
          %s532 = scalar_lea.vmem [#allocation9], %s531
          %533 = dma.done %s529, 128
        $region64: #{tpu_custom_call.1} parent=59 // pred_fallthru
          _
      $region60: #{tpu_custom_call.1} parent=5 // pred_fallthru
        _
    $region6: #{tpu_custom_call.1} parent=1 // loop_footer
      %s22 = sadd.s32 1, %s18
    $region7: #{tpu_custom_call.1} parent=1 // loop_footer_branch
      %17 = sbr.rel target = $region3
    $region8: #{tpu_custom_call.1} parent=1 // loop_exit
      _
    %534 = vsyncpa [#allocation4], 1
    %s535 = scalar_lea.sflag [#allocation4], 1
    %536 = vsyncpa %s535, 1
    %537 = vsyncpa [#allocation7], 1
    %538 = vsyncpa [#allocation5], 1
    %s539 = scalar_lea.sflag [#allocation5], 1
    %540 = vsyncpa %s539, 1

</llo_original>
